<compile_context>
chip_gen: v5e
topology: v5e:2x2
jax: 0.10.0
libtpu: 0.0.40
codegen_flags: <defaults>
</compile_context>

<pallas_src>
import functools

import jax
import jax.numpy as jnp
import numpy as np
from jax.experimental import pallas as pl
from jax.experimental.pallas import tpu as pltpu


def _to_3tuple(v):
    return (v, v, v) if isinstance(v, int) else tuple(v)


def _round_up(a, b):
    return ((a + b - 1) // b) * b


def _vmem_capacity_bytes():
    """Per-core VMEM capacity; conservative fallback if the query fails."""
    try:
        cap = getattr(pltpu.get_tpu_info(), "vmem_capacity_bytes", None)
        if cap:
            return int(cap)
    except Exception:
        pass
    return 64 << 20  # v7x per-TensorCore VMEM (smallest current generation)


def _choose_tile_m(M, block_m, bytes_per_row, vmem_budget):
    """Pick the M tile: multiple of 16 (bf16 sublane packing), >= 4 grid steps
    when M is large enough (so v7x's two TensorCores each get >= 2 steps),
    fits the VMEM budget, and prefers an exact divisor of M (avoids a ragged,
    masked last block)."""
    if M <= 16:
        return M
    cap = min(block_m, _round_up(M, 16))
    if M >= 64:
        # >= 4 grid steps (2 per v7x TensorCore under "parallel" semantics).
        cap = min(cap, max(16, _round_up(pl.cdiv(M, 4), 16)))
    while cap > 16 and cap * bytes_per_row > vmem_budget:
        cap -= 16
    cap = max(16, cap - cap % 16)
    tm = cap
    while tm >= 16 and cap - tm <= 256:
        if M % tm == 0:
            return tm                      # exact divisor: no ragged block
        tm -= 16
    return cap                             # ragged last block -> masked writes


# ---------------------------------------------------------------------------
# Pallas kernel: one (TM, Kp) x (Kp, Np) MXU matmul per grid step + bias add.
# Weight and bias blocks are constant across the grid -> fetched once and
# VMEM-resident; the patch tile and output tile are double-buffered by Pallas.
# ---------------------------------------------------------------------------
def _patch_embed_kernel(p_ref, w_ref, b_ref, o_ref):
    acc = jnp.dot(p_ref[...], w_ref[...], preferred_element_type=jnp.float32)
    o_ref[...] = (acc + b_ref[...]).astype(o_ref.dtype)


def _extract_patches_ncthw(x, patch_size, stride):
    """(B, C, T, H, W) -> (B*t*h*w, C*pt*ph*pw); patch vector ordered
    (C, pt, ph, pw) to match PyTorch Conv3d weight flattening."""
    B, C, T, H, W = x.shape
    pt, ph, pw = patch_size
    st, sh, sw = stride
    t = (T - pt) // st + 1
    h = (H - ph) // sh + 1
    w = (W - pw) // sw + 1
    K = C * pt * ph * pw

    if (pt, ph, pw) == (st, sh, sw):
        # Non-overlapping (module default): pure reshape + single transpose,
        # no im2col expansion; XLA fuses the bf16 cast into this pass.
        xc = x[:, :, : t * pt, : h * ph, : w * pw]
        xc = xc.reshape(B, C, t, pt, h, ph, w, pw)
        xc = jnp.transpose(xc, (0, 2, 4, 6, 1, 3, 5, 7))  # (B,t,h,w,C,pt,ph,pw)
        return xc.reshape(B * t * h * w, K), (t, h, w)

    # Overlapping stride: gather element (kt, kh, kw) of every patch.
    # TODO(synk): fuse this gather into the kernel for overlapping strides to
    # avoid the expanded im2col HBM round trip.
    cols = []
    for kt in range(pt):
        for kh in range(ph):
            for kw in range(pw):
                cols.append(
                    x[:, :, kt:kt + st * t:st, kh:kh + sh * h:sh,
                      kw:kw + sw * w:sw])
    p = jnp.stack(cols, axis=2)                    # (B, C, pt*ph*pw, t, h, w)
    p = jnp.transpose(p, (0, 3, 4, 5, 1, 2)).reshape(B * t * h * w, K)
    return p, (t, h, w)


class PatchEmbed3DNewPallas:
    """JAX/Pallas port of PatchEmbed3D_new (forward only)."""

    def __init__(self, video_size=(16, 224, 224), patch_size=(2, 16, 16),
                 in_chans=3, embed_dim=768, stride=(2, 16, 16), *,
                 block_m=None, compute_dtype=jnp.bfloat16, out_dtype=None,
                 param_dtype=jnp.float32, key=None):
        self.video_size = _to_3tuple(video_size)
        self.patch_size = _to_3tuple(patch_size)
        self.stride = _to_3tuple(stride)
        self.in_chans = in_chans
        self.embed_dim = embed_dim
        self.compute_dtype = compute_dtype
        # bf16 output by default (halves kernel store traffic on v6e/v7x);
        # pass out_dtype=jnp.float32 if downstream needs f32.
        self.out_dtype = compute_dtype if out_dtype is None else out_dtype

        self._vmem_cap = _vmem_capacity_bytes()
        if block_m is None:
            # v5e/v6e (128 MiB VMEM) afford 1024-row tiles; v7x (64 MiB) 512.
            block_m = 1024 if self._vmem_cap >= (96 << 20) else 512
        self.block_m = max(16, (int(block_m) // 16) * 16)

        pt, ph, pw = self.patch_size
        st, sh, sw = self.stride
        t = (self.video_size[0] - pt) // st + 1
        h = (self.video_size[1] - ph) // sh + 1
        w = (self.video_size[2] - pw) // sw + 1
        self.patch_thw = (t, h, w)
        self.num_patches = t * h * w

        if key is None:
            key = jax.random.PRNGKey(0)
        kw_, kb_ = jax.random.split(key)
        fan_in = in_chans * pt * ph * pw
        bound = 1.0 / np.sqrt(fan_in)
        # Conv3d weight: (embed_dim, in_chans, pt, ph, pw); bias: (embed_dim,)
        self.weight = jax.random.uniform(
            kw_, (embed_dim, in_chans, pt, ph, pw), param_dtype,
            minval=-bound, maxval=bound)
        self.bias = jax.random.uniform(
            kb_, (embed_dim,), param_dtype, minval=-bound, maxval=bound)

        # Pre-transposed / pre-cast / lane-padded GEMM operands (built once).
        self.K = fan_in
        self.Kp = _round_up(fan_in, 128)       # dense lane loads / MXU K passes
        self.Np = _round_up(embed_dim, 128)    # lane-dense output stores
        w2d = self.weight.reshape(embed_dim, self.K).T.astype(compute_dtype)
        self._w2d = jnp.pad(
            w2d, ((0, self.Kp - self.K), (0, self.Np - embed_dim)))
        self._b2d = jnp.pad(
            self.bias.astype(jnp.float32).reshape(1, embed_dim),
            ((0, 0), (0, self.Np - embed_dim)))

    @functools.partial(jax.jit, static_argnums=0)
    def __call__(self, x):
        # x: (B, C, T, H, W)  ->  (B, num_patches, embed_dim)
        B, C, T, H, W = x.shape
        K, Kp, N, Np = self.K, self.Kp, self.embed_dim, self.Np
        out_dtype = self.out_dtype
        itm = jnp.dtype(self.compute_dtype).itemsize
        ito = jnp.dtype(out_dtype).itemsize

        # Patch extraction in the compute dtype (bf16): a single fused XLA
        # pass (read x f32, write patch matrix bf16) for the default
        # non-overlapping stride.
        p2d, (t, h, w) = _extract_patches_ncthw(
            x.astype(self.compute_dtype), self.patch_size, self.stride)
        M = B * t * h * w
        if Kp != K:
            # Rare: K not lane-aligned; zero padding is numerically exact.
            p2d = jnp.pad(p2d, ((0, 0), (0, Kp - K)))

        # VMEM budgeting (per-generation): weight/bias are grid-invariant
        # (constant index maps) but conservatively counted double-buffered;
        # LHS/output tiles are double-buffered by the Pallas pipeliner.
        fixed = 2 * Kp * Np * itm + 2 * Np * 4
        per_row = 2 * Kp * itm + 2 * Np * ito
        budget = int(self._vmem_cap * 0.7)
        TM = _choose_tile_m(M, self.block_m, per_row,
                            max(budget - fixed, 32 * per_row))
        n_m = pl.cdiv(M, TM)
        need = fixed + TM * per_row
        vmem_limit = int(min(max(need * 5 // 4 + (2 << 20), 16 << 20),
                             self._vmem_cap - (2 << 20)))

        cost = pl.CostEstimate(
            flops=2 * M * Kp * Np,
            transcendentals=0,
            bytes_accessed=M * Kp * itm + Kp * Np * itm + Np * 4 + M * Np * ito)

        out = pl.pallas_call(
            _patch_embed_kernel,
            out_shape=jax.ShapeDtypeStruct((M, Np), out_dtype),
            grid=(n_m,),
            in_specs=[
                pl.BlockSpec((TM, Kp), lambda i: (i, 0)),   # patch tile (pipelined)
                pl.BlockSpec((Kp, Np), lambda i: (0, 0)),   # weight (VMEM-resident)
                pl.BlockSpec((1, Np), lambda i: (0, 0)),    # bias   (VMEM-resident)
            ],
            out_specs=pl.BlockSpec((TM, Np), lambda i: (i, 0)),
            compiler_params=pltpu.CompilerParams(
                dimension_semantics=("parallel",),   # v7x: shard M over 2 TCs
                vmem_limit_bytes=vmem_limit),
            cost_estimate=cost,
        )(p2d, self._w2d, self._b2d)

        if Np != N:
            out = out[:, :N]
        return out.reshape(B, t * h * w, N)


def _reference_forward(x, weight, bias, stride):
    """Pure-JAX f32 reference: conv3d -> flatten(2) -> transpose(1,2)."""
    y = jax.lax.conv_general_dilated(
        x, weight, window_strides=stride, padding="VALID",
        dimension_numbers=("NCDHW", "OIDHW", "NCDHW"))
    y = y + bias.reshape(1, -1, 1, 1, 1)
    B, E = y.shape[:2]
    return jnp.transpose(y.reshape(B, E, -1), (0, 2, 1))


if __name__ == "__main__":
    key = jax.random.PRNGKey(0)
    k_param, k_x = jax.random.split(key)

    # Small, module-consistent shapes: B=2, C=3, video (8, 64, 64),
    # patch (2, 8, 8) == stride (non-overlapping) -> 4*8*8 = 256 patches per
    # sample, embed_dim=128 (lane-dense).  M = 512, K = 384 (128-aligned);
    # the chosen M tile (128) divides M exactly and yields a 4-step grid so
    # both v7x TensorCores get work and no pad/slice passes are emitted.
    B, C, T, H, W = 2, 3, 8, 64, 64
    module = PatchEmbed3DNewPallas(
        video_size=(T, H, W), patch_size=(2, 8, 8), in_chans=C, embed_dim=128,
        stride=(2, 8, 8), key=k_param)

    x = jax.random.normal(k_x, (B, C, T, H, W), jnp.float32)

    out = jax.block_until_ready(module(x))
    assert out.shape == (B, module.num_patches, module.embed_dim), out.shape
    assert out.dtype == jnp.dtype(module.out_dtype), out.dtype

    ref = jax.block_until_ready(
        _reference_forward(x, module.weight, module.bias, module.stride))
    # bf16 MXU inputs / bf16 output with f32 accumulation vs the f32 conv
    # reference: quantize the reference to bf16 for a like-for-like compare.
    ref_q = np.asarray(ref.astype(jnp.bfloat16).astype(jnp.float32))
    out_f32 = np.asarray(out.astype(jnp.float32))
    np.testing.assert_allclose(out_f32, ref_q, rtol=3e-2, atol=3e-2)

    print("KERNEL_OK")
</pallas_src>

<mosaic_0001>
module attributes {stable_mosaic.version = 11 : i64} {
  func.func @_patch_embed_kernel(%arg0: i32, %arg1: memref<128x384xbf16, #tpu.memory_space<vmem>>, %arg2: memref<384x128xbf16, #tpu.memory_space<vmem>>, %arg3: memref<1x128xf32, #tpu.memory_space<vmem>>, %arg4: memref<128x128xbf16, #tpu.memory_space<vmem>>) attributes {dimension_semantics = [#tpu.dimension_semantics<parallel>], iteration_bounds = array<i64: 4>, scalar_prefetch = 0 : i64, scratch_operands = 0 : i64, tpu.core_type = #tpu.core_type<tc>, window_params = [{transform_indices = @transform_0, window_bounds = array<i64: 128, 384>}, {pipeline_mode = #tpu.pipeline_mode<synchronous>, transform_indices = @transform_1, window_bounds = array<i64: 384, 128>}, {pipeline_mode = #tpu.pipeline_mode<synchronous>, transform_indices = @transform_2, window_bounds = array<i64: 1, 128>}, {transform_indices = @transform_3, window_bounds = array<i64: 128, 128>}]} {
    %c0 = arith.constant 0 : index
    %c0_0 = arith.constant 0 : index
    %0 = vector.load %arg1[%c0, %c0_0] : memref<128x384xbf16, #tpu.memory_space<vmem>>, vector<128x384xbf16>
    %c0_1 = arith.constant 0 : index
    %c0_2 = arith.constant 0 : index
    %1 = vector.load %arg2[%c0_1, %c0_2] : memref<384x128xbf16, #tpu.memory_space<vmem>>, vector<384x128xbf16>
    %cst = arith.constant dense<0.000000e+00> : vector<128x128xf32>
    %2 = tpu.matmul %0, %1, %cst {dimension_numbers = #tpu.dot_dimension_numbers<[1], [0], [0], [1], [0, 0, 1, 1], [], []>} : vector<128x384xbf16>, vector<384x128xbf16>, vector<128x128xf32> -> vector<128x128xf32>
    %c0_3 = arith.constant 0 : index
    %c0_4 = arith.constant 0 : index
    %3 = vector.load %arg3[%c0_3, %c0_4] : memref<1x128xf32, #tpu.memory_space<vmem>>, vector<1x128xf32>
    %4 = vector.broadcast %3 : vector<1x128xf32> to vector<128x128xf32>
    %5 = arith.addf %2, %4 : vector<128x128xf32>
    %6 = arith.truncf %5 : vector<128x128xf32> to vector<128x128xbf16>
    %c0_5 = arith.constant 0 : index
    %c0_6 = arith.constant 0 : index
    %7 = vector.load %arg4[%c0_5, %c0_6] : memref<128x128xbf16, #tpu.memory_space<vmem>>, vector<128x128xbf16>
    tpu.vector_store %arg4[%c0_5, %c0_6], %6 {strides = array<i32>} : memref<128x128xbf16, #tpu.memory_space<vmem>>, vector<128x128xbf16>,
    return
  }
  func.func @transform_0(%arg0: i32) -> (i32, i32) {
    %c0_i32 = arith.constant 0 : i32
    %c0_i32_0 = arith.constant 0 : i32
    return %arg0, %c0_i32 : i32, i32
  }
  func.func @transform_1(%arg0: i32) -> (i32, i32) {
    %c0_i32 = arith.constant 0 : i32
    %c0_i32_0 = arith.constant 0 : i32
    %c0_i32_1 = arith.constant 0 : i32
    return %c0_i32, %c0_i32_0 : i32, i32
  }
  func.func @transform_2(%arg0: i32) -> (i32, i32) {
    %c0_i32 = arith.constant 0 : i32
    %c0_i32_0 = arith.constant 0 : i32
    %c0_i32_1 = arith.constant 0 : i32
    return %c0_i32, %c0_i32_0 : i32, i32
  }
  func.func @transform_3(%arg0: i32) -> (i32, i32) {
    %c0_i32 = arith.constant 0 : i32
    %c0_i32_0 = arith.constant 0 : i32
    return %arg0, %c0_i32 : i32, i32
  }
}

</mosaic_0001>

<llo_original>
// kernel: a_call__.1
$region0: #{a_call__.1}
  #allocation0 [shape = 'u32[]', space=smem, size = 0x4, offset = 0x4, fixed_abs, tag = 'smem constant byte address 0x4 - core index']
  #allocation1 [shape = 'u32[72,128]{1,0:T(1,128)}', space=vmem, size = 0x9000, scoped, tag = 'internal scratch']
  %s0 = inlined_call_operand.vmem [shape: bf16[512,384], index: 0, kind: input, shape index: {}]
  %s1 = inlined_call_operand.vmem [shape: bf16[384,128], index: 1, kind: input, shape index: {}]
  %s2 = inlined_call_operand.vmem [shape: f32[1,128], index: 2, kind: input, shape index: {}]
  %s3 = inlined_call_operand.hbm [shape: bf16[512,128], index: 3, kind: output, shape index: {}]
  %s4 = sld [smem:[#allocation0]]
  $region45: #{a_call__.1} parent=0
    _
  %s6 = ssub.s32 1, %s4
  %s7 = scalar_select 0, %s6, %s4
  $region1: #{a_call__.1} parent=0
    #allocation2 [shape = 'u8[65536]{0}', space=vmem, size = 0x10000, scoped, tag = 'output window, operand 0']
    #allocation3 [shape = 's32[2]{0}', space=sflag, size = 0x8, scoped, tag = 'scoped memory for a_call__.1']
    %8 = vsyncpa [#allocation3], 0
    %s9 = scalar_lea.sflag [#allocation3], 1
    %10 = vsyncpa %s9, 0
    loop: start=0, step=1, limit=6
    $region2: #{a_call__.1} parent=1 // loop_pre_header
      _
    $region3: #{a_call__.1} parent=1 // loop_header
      %s12 = sphi 0, %s16
      %p13 = scmp.ge.s32.totalorder %s12, 6
      %s22 = sphi 0, %s24
      %s25 = sphi 0, %s22
      %s26 = sphi 0, %s25
      %s42 = sphi 0, %s26
      %s46 = sphi 0, %s46
      %s48 = sphi 0, %s46
      %s49 = sphi 0, %s48
      %s63 = sphi 0, %s49
      %s67 = sphi 0, %s67
      %s69 = sphi 0, %s67
      %s70 = sphi 0, %s69
      %s84 = sphi 0, %s70
      %s90 = sphi 0, %s92
      %s93 = sphi 0, %s90
      %s94 = sphi 0, %s93
      %s110 = sphi 0, %s94
    $region4: #{a_call__.1} parent=1 // loop_header_branch
      %15 = sbr.rel (%p13) target = $region8
    $region5: #{a_call__.1} parent=1 // loop_body
      %s17 = ssub.s32 %s12, 1
      %s18 = ssub.s32 %s12, 2
      %s19 = sadd.s32 %s12, 1
      %s20 = ssub.s32 %s12, %s19
      %p21 = scmp.eq.s32.totalorder %s20, 0
      %s23 = sadd.s32 %s22, 1
      %s24 = scalar_select %p21, %s22, %s23
      %p27 = pneg %p21
      %p28 = scmp.eq.s32.totalorder %s12, 3
      %p29 = por %p27, %p28
      %p30 = scmp.ne.s32.totalorder %s22, %s25
      %p31 = scmp.eq.s32.totalorder %s12, 0
      %p32 = por %p30, %p31
      %p33 = scmp.ne.s32.totalorder %s22, %s25
      %p34 = scmp.eq.s32.totalorder %s17, 3
      %p35 = por %p33, %p34
      %p36 = scmp.ne.s32.totalorder %s25, %s26
      %p37 = scmp.eq.s32.totalorder %s17, 0
      %p38 = por %p36, %p37
      %p39 = scmp.ne.s32.totalorder %s25, %s26
      %p40 = scmp.eq.s32.totalorder %s18, 3
      %p41 = por %p39, %p40
      %p43 = scmp.ne.s32.totalorder %s26, %s42
      %p44 = scmp.eq.s32.totalorder %s18, 0
      %p45 = por %p43, %p44
      %s47 = sadd.s32 %s46, 1
      %p50 = scmp.eq.s32.totalorder %s12, 3
      %p51 = scmp.ne.s32.totalorder %s46, %s48
      %p52 = scmp.eq.s32.totalorder %s12, 0
      %p53 = por %p51, %p52
      %p54 = scmp.ne.s32.totalorder %s46, %s48
      %p55 = scmp.eq.s32.totalorder %s17, 3
      %p56 = por %p54, %p55
      %p57 = scmp.ne.s32.totalorder %s48, %s49
      %p58 = scmp.eq.s32.totalorder %s17, 0
      %p59 = por %p57, %p58
      %p60 = scmp.ne.s32.totalorder %s48, %s49
      %p61 = scmp.eq.s32.totalorder %s18, 3
      %p62 = por %p60, %p61
      %p64 = scmp.ne.s32.totalorder %s49, %s63
      %p65 = scmp.eq.s32.totalorder %s18, 0
      %p66 = por %p64, %p65
      %s68 = sadd.s32 %s67, 1
      %p71 = scmp.eq.s32.totalorder %s12, 3
      %p72 = scmp.ne.s32.totalorder %s67, %s69
      %p73 = scmp.eq.s32.totalorder %s12, 0
      %p74 = por %p72, %p73
      %p75 = scmp.ne.s32.totalorder %s67, %s69
      %p76 = scmp.eq.s32.totalorder %s17, 3
      %p77 = por %p75, %p76
      %p78 = scmp.ne.s32.totalorder %s69, %s70
      %p79 = scmp.eq.s32.totalorder %s17, 0
      %p80 = por %p78, %p79
      %p81 = scmp.ne.s32.totalorder %s69, %s70
      %p82 = scmp.eq.s32.totalorder %s18, 3
      %p83 = por %p81, %p82
      %p85 = scmp.ne.s32.totalorder %s70, %s84
      %p86 = scmp.eq.s32.totalorder %s18, 0
      %p87 = por %p85, %p86
      %s88 = ssub.s32 %s12, %s19
      %p89 = scmp.eq.s32.totalorder %s88, 0
      %s91 = sadd.s32 %s90, 1
      %s92 = scalar_select %p89, %s90, %s91
      %p95 = pneg %p89
      %p96 = scmp.eq.s32.totalorder %s12, 3
      %p97 = por %p95, %p96
      %p98 = scmp.ne.s32.totalorder %s90, %s93
      %p99 = scmp.eq.s32.totalorder %s12, 0
      %p100 = por %p98, %p99
      %p101 = scmp.ne.s32.totalorder %s90, %s93
      %p102 = scmp.eq.s32.totalorder %s17, 3
      %p103 = por %p101, %p102
      %p104 = scmp.ne.s32.totalorder %s93, %s94
      %p105 = scmp.eq.s32.totalorder %s17, 0
      %p106 = por %p104, %p105
      %p107 = scmp.ne.s32.totalorder %s93, %s94
      %p108 = scmp.eq.s32.totalorder %s18, 3
      %p109 = por %p107, %p108
      %p111 = scmp.ne.s32.totalorder %s94, %s110
      %p112 = scmp.eq.s32.totalorder %s18, 0
      %p113 = por %p111, %p112
      %p114 = scmp.le.s32.totalorder 1, %s12
      %p115 = scmp.lt.s32.totalorder %s12, 5
      %p116 = pnand %p114, %p115
      %p117 = pneg %p116
      // Predicated region
      $region9: #{a_call__.1} parent=5 // pred_check
        _
      $region10: #{a_call__.1} parent=5 // pred_check_branch
        %119 = sbr.rel (%p116) target = $region12
      $region11: #{a_call__.1} parent=5 // pred_region
        %s120 = ssub.s32 %s12, 1
        // Predicated region
        $region13: #{a_call__.1} parent=11 // pred_check
          %p121 = pneg %p59
        $region14: #{a_call__.1} parent=11 // pred_check_branch
          %123 = sbr.rel (%p121) target = $region16
        $region15: #{a_call__.1} parent=11 // pred_region
          _
        $region16: #{a_call__.1} parent=11 // pred_fallthru
          _
        // Predicated region
        $region17: #{a_call__.1} parent=11 // pred_check
          %p124 = pneg %p80
        $region18: #{a_call__.1} parent=11 // pred_check_branch
          %126 = sbr.rel (%p124) target = $region20
        $region19: #{a_call__.1} parent=11 // pred_region
          _
        $region20: #{a_call__.1} parent=11 // pred_fallthru
          _
      $region12: #{a_call__.1} parent=5 // pred_fallthru
        _
      %p127 = scmp.lt.s32.totalorder %s12, 4
      // Predicated region
      $region21: #{a_call__.1} parent=5 // pred_check
        %p128 = pneg %p127
      $region22: #{a_call__.1} parent=5 // pred_check_branch
        %130 = sbr.rel (%p128) target = $region24
      $region23: #{a_call__.1} parent=5 // pred_region
        // Predicated region
        $region25: #{a_call__.1} parent=23 // pred_check
          %p131 = pneg %p32
        $region26: #{a_call__.1} parent=23 // pred_check_branch
          %133 = sbr.rel (%p131) target = $region28
        $region27: #{a_call__.1} parent=23 // pred_region
          %s134 = smul.u32 16, %s12
          %p135 = scmp.lt.s32.totalorder %s134, 63
          %s136 = scalar_select %p135, %s134, 63
          %s137 = smul.addr %s136, 3
          %s138 = smul.addr %s137, 4
          %s139 = scalar_lea.vmem %s0, %s138
          %s140 = smul.u32 16, %s12
        $region28: #{a_call__.1} parent=23 // pred_fallthru
          _
      $region24: #{a_call__.1} parent=5 // pred_fallthru
        _
      %p141 = scmp.le.s32.totalorder 1, %s12
      %p142 = scmp.lt.s32.totalorder %s12, 5
      %p143 = pnand %p141, %p142
      %p144 = pneg %p143
      // Predicated region
      $region29: #{a_call__.1} parent=5 // pred_check
        _
      $region30: #{a_call__.1} parent=5 // pred_check_branch
        %146 = sbr.rel (%p143) target = $region32
      $region31: #{a_call__.1} parent=5 // pred_region
        %s147 = ssub.s32 %s12, 1
        %s148 = smul.u32 16, %s17
        %p149 = scmp.lt.s32.totalorder %s148, 63
        %s150 = scalar_select %p149, %s148, 63
        %s151 = smul.addr %s150, 3
        %s152 = smul.addr %s151, 4
        %s153 = scalar_lea.vmem %s0, %s152
        %p154 = pneg %p38
        %p155 = pneg %p35
        %p156 = pneg %p59
        %p157 = pneg %p56
        %p158 = pneg %p80
        %p159 = pneg %p77
        %p160 = pneg %p106
        %p161 = pneg %p103
        %s162 = sand.u32 %s93, 1
        %s163 = scalar_lea.sflag [#allocation3], %s162
        %s164 = sand.u32 %s93, 1
        %s165 = smul.addr %s164, 64
        %s166 = scalar_lea.vmem [#allocation2], %s165
        %s167 = smul.u32 16, %s17
        %p168 = scmp.lt.s32.totalorder %s167, 63
        %s169 = scalar_select %p168, %s167, 63
        %s170 = smul.addr %s169, 3
        %s171 = smul.addr %s170, 4
        %s172 = scalar_lea.vmem %s0, %s171
        %s173 = smul.u32 16, %s17
        %s174 = smul.u32 16, %s17
        %v175 = vld [vmem:[%s172] sm:$0xff]
        %v176 = vld [vmem:[%s172 + $0x8] sm:$0xf]
        %v177 = vld [vmem:[%s172 + $0xc] sm:$0xff]
        %v178 = vld [vmem:[%s172 + $0x14] sm:$0xf]
        %v179 = vld [vmem:[%s172 + $0x18] sm:$0xff]
        %v180 = vld [vmem:[%s172 + $0x20] sm:$0xf]
        %v181 = vld [vmem:[%s172 + $0x24] sm:$0xff]
        %v182 = vld [vmem:[%s172 + $0x2c] sm:$0xf]
        %v183 = vld [vmem:[%s172 + $0x30] sm:$0xff]
        %v184 = vld [vmem:[%s172 + $0x38] sm:$0xf]
        %v185 = vld [vmem:[%s172 + $0x3c] sm:$0xff]
        %v186 = vld [vmem:[%s172 + $0x44] sm:$0xf]
        %v187 = vld [vmem:[%s172 + $0x48] sm:$0xff]
        %v188 = vld [vmem:[%s172 + $0x50] sm:$0xf]
        %v189 = vld [vmem:[%s172 + $0x54] sm:$0xff]
        %v190 = vld [vmem:[%s172 + $0x5c] sm:$0xf]
        %v191 = vld [vmem:[%s172 + $0x60] sm:$0xff]
        %v192 = vld [vmem:[%s172 + $0x68] sm:$0xf]
        %v193 = vld [vmem:[%s172 + $0x6c] sm:$0xff]
        %v194 = vld [vmem:[%s172 + $0x74] sm:$0xf]
        %v195 = vld [vmem:[%s172 + $0x78] sm:$0xff]
        %v196 = vld [vmem:[%s172 + $0x80] sm:$0xf]
        %v197 = vld [vmem:[%s172 + $0x84] sm:$0xff]
        %v198 = vld [vmem:[%s172 + $0x8c] sm:$0xf]
        %v199 = vld [vmem:[%s172 + $0x90] sm:$0xff]
        %v200 = vld [vmem:[%s172 + $0x98] sm:$0xf]
        %v201 = vld [vmem:[%s172 + $0x9c] sm:$0xff]
        %v202 = vld [vmem:[%s172 + $0xa4] sm:$0xf]
        %v203 = vld [vmem:[%s172 + $0xa8] sm:$0xff]
        %v204 = vld [vmem:[%s172 + $0xb0] sm:$0xf]
        %v205 = vld [vmem:[%s172 + $0xb4] sm:$0xff]
        %v206 = vld [vmem:[%s172 + $0xbc] sm:$0xf]
        %v207 = vld [vmem:[%s1] sm:$0xf]
        %v208 = vld [vmem:[%s1 + $0x4] sm:$0xf]
        %v209 = vld [vmem:[%s1 + $0x8] sm:$0xf]
        %v210 = vld [vmem:[%s1 + $0xc] sm:$0xf]
        %v211 = vld [vmem:[%s1 + $0x10] sm:$0xf]
        %v212 = vld [vmem:[%s1 + $0x14] sm:$0xf]
        %v213 = vld [vmem:[%s1 + $0x18] sm:$0xf]
        %v214 = vld [vmem:[%s1 + $0x1c] sm:$0xf]
        %v215 = vld [vmem:[%s1 + $0x20] sm:$0xf]
        %v216 = vld [vmem:[%s1 + $0x24] sm:$0xf]
        %v217 = vld [vmem:[%s1 + $0x28] sm:$0xf]
        %v218 = vld [vmem:[%s1 + $0x2c] sm:$0xf]
        %v219 = vld [vmem:[%s1 + $0x30] sm:$0xf]
        %v220 = vld [vmem:[%s1 + $0x34] sm:$0xf]
        %v221 = vld [vmem:[%s1 + $0x38] sm:$0xf]
        %v222 = vld [vmem:[%s1 + $0x3c] sm:$0xf]
        %v223 = vld [vmem:[%s1 + $0x40] sm:$0xf]
        %v224 = vld [vmem:[%s1 + $0x44] sm:$0xf]
        %v225 = vld [vmem:[%s1 + $0x48] sm:$0xf]
        %v226 = vld [vmem:[%s1 + $0x4c] sm:$0xf]
        %v227 = vld [vmem:[%s1 + $0x50] sm:$0xf]
        %v228 = vld [vmem:[%s1 + $0x54] sm:$0xf]
        %v229 = vld [vmem:[%s1 + $0x58] sm:$0xf]
        %v230 = vld [vmem:[%s1 + $0x5c] sm:$0xf]
        %v231 = vld [vmem:[%s1 + $0x60] sm:$0xf]
        %v232 = vld [vmem:[%s1 + $0x64] sm:$0xf]
        %v233 = vld [vmem:[%s1 + $0x68] sm:$0xf]
        %v234 = vld [vmem:[%s1 + $0x6c] sm:$0xf]
        %v235 = vld [vmem:[%s1 + $0x70] sm:$0xf]
        %v236 = vld [vmem:[%s1 + $0x74] sm:$0xf]
        %v237 = vld [vmem:[%s1 + $0x78] sm:$0xf]
        %v238 = vld [vmem:[%s1 + $0x7c] sm:$0xf]
        %v239 = vld [vmem:[%s1 + $0x80] sm:$0xf]
        %v240 = vld [vmem:[%s1 + $0x84] sm:$0xf]
        %v241 = vld [vmem:[%s1 + $0x88] sm:$0xf]
        %v242 = vld [vmem:[%s1 + $0x8c] sm:$0xf]
        %v243 = vld [vmem:[%s1 + $0x90] sm:$0xf]
        %v244 = vld [vmem:[%s1 + $0x94] sm:$0xf]
        %v245 = vld [vmem:[%s1 + $0x98] sm:$0xf]
        %v246 = vld [vmem:[%s1 + $0x9c] sm:$0xf]
        %v247 = vld [vmem:[%s1 + $0xa0] sm:$0xf]
        %v248 = vld [vmem:[%s1 + $0xa4] sm:$0xf]
        %v249 = vld [vmem:[%s1 + $0xa8] sm:$0xf]
        %v250 = vld [vmem:[%s1 + $0xac] sm:$0xf]
        %v251 = vld [vmem:[%s1 + $0xb0] sm:$0xf]
        %v252 = vld [vmem:[%s1 + $0xb4] sm:$0xf]
        %v253 = vld [vmem:[%s1 + $0xb8] sm:$0xf]
        %v254 = vld [vmem:[%s1 + $0xbc] sm:$0xf]
        %v255 = vld [vmem:[%s2] sm:$0x1]
        %v257 = vperm.slane %v255, 0
        %v291 = vunpack.c.l.b16 %v175
        %v292 = vunpack.c.h.b16 %v175
        %v293 = vunpack.c.l.b16 %v176
        %v294 = vunpack.c.l.b16 %v177
        %v295 = vunpack.c.h.b16 %v177
        %v296 = vunpack.c.l.b16 %v178
        %v297 = vunpack.c.l.b16 %v179
        %v298 = vunpack.c.h.b16 %v179
        %v299 = vunpack.c.l.b16 %v180
        %v300 = vunpack.c.l.b16 %v181
        %v301 = vunpack.c.h.b16 %v181
        %v302 = vunpack.c.l.b16 %v182
        %v303 = vunpack.c.l.b16 %v183
        %v304 = vunpack.c.h.b16 %v183
        %v305 = vunpack.c.l.b16 %v184
        %v306 = vunpack.c.l.b16 %v185
        %v307 = vunpack.c.h.b16 %v185
        %v308 = vunpack.c.l.b16 %v186
        %v309 = vunpack.c.l.b16 %v187
        %v310 = vunpack.c.h.b16 %v187
        %v311 = vunpack.c.l.b16 %v188
        %v312 = vunpack.c.l.b16 %v189
        %v313 = vunpack.c.h.b16 %v189
        %v314 = vunpack.c.l.b16 %v190
        %v315 = vunpack.c.l.b16 %v191
        %v316 = vunpack.c.h.b16 %v191
        %v317 = vunpack.c.l.b16 %v192
        %v318 = vunpack.c.l.b16 %v193
        %v319 = vunpack.c.h.b16 %v193
        %v320 = vunpack.c.l.b16 %v194
        %v321 = vunpack.c.l.b16 %v195
        %v322 = vunpack.c.h.b16 %v195
        %v323 = vunpack.c.l.b16 %v196
        %v324 = vunpack.c.l.b16 %v197
        %v325 = vunpack.c.h.b16 %v197
        %v326 = vunpack.c.l.b16 %v198
        %v327 = vunpack.c.l.b16 %v199
        %v328 = vunpack.c.h.b16 %v199
        %v329 = vunpack.c.l.b16 %v200
        %v330 = vunpack.c.l.b16 %v201
        %v331 = vunpack.c.h.b16 %v201
        %v332 = vunpack.c.l.b16 %v202
        %v333 = vunpack.c.l.b16 %v203
        %v334 = vunpack.c.h.b16 %v203
        %v335 = vunpack.c.l.b16 %v204
        %v336 = vunpack.c.l.b16 %v205
        %v337 = vunpack.c.h.b16 %v205
        %v338 = vunpack.c.l.b16 %v206
        %v339 = vpack.c.b16 %v294, %v291
        %v340 = vpack.c.b16 %v295, %v292
        %v341 = vpack.c.b16 %v296, %v293
        %v342 = vpack.c.b16 %v300, %v297
        %v343 = vpack.c.b16 %v301, %v298
        %v344 = vpack.c.b16 %v302, %v299
        %v345 = vpack.c.b16 %v306, %v303
        %v346 = vpack.c.b16 %v307, %v304
        %v347 = vpack.c.b16 %v308, %v305
        %v348 = vpack.c.b16 %v312, %v309
        %v349 = vpack.c.b16 %v313, %v310
        %v350 = vpack.c.b16 %v314, %v311
        %v351 = vpack.c.b16 %v318, %v315
        %v352 = vpack.c.b16 %v319, %v316
        %v353 = vpack.c.b16 %v320, %v317
        %v354 = vpack.c.b16 %v324, %v321
        %v355 = vpack.c.b16 %v325, %v322
        %v356 = vpack.c.b16 %v326, %v323
        %v357 = vpack.c.b16 %v330, %v327
        %v358 = vpack.c.b16 %v331, %v328
        %v359 = vpack.c.b16 %v332, %v329
        %v360 = vpack.c.b16 %v336, %v333
        %v361 = vpack.c.b16 %v337, %v334
        %v362 = vpack.c.b16 %v338, %v335
        %v435 = vunpack.c.l.b16 %v207
        %v436 = vunpack.c.l.b16 %v208
        %v437 = vunpack.c.l.b16 %v209
        %v438 = vunpack.c.l.b16 %v210
        %v439 = vunpack.c.l.b16 %v211
        %v440 = vunpack.c.l.b16 %v212
        %v441 = vunpack.c.l.b16 %v213
        %v442 = vunpack.c.l.b16 %v214
        %v443 = vunpack.c.l.b16 %v215
        %v444 = vunpack.c.l.b16 %v216
        %v445 = vunpack.c.l.b16 %v217
        %v446 = vunpack.c.l.b16 %v218
        %v447 = vunpack.c.l.b16 %v219
        %v448 = vunpack.c.l.b16 %v220
        %v449 = vunpack.c.l.b16 %v221
        %v450 = vunpack.c.l.b16 %v222
        %v451 = vunpack.c.l.b16 %v223
        %v452 = vunpack.c.l.b16 %v224
        %v453 = vunpack.c.l.b16 %v225
        %v454 = vunpack.c.l.b16 %v226
        %v455 = vunpack.c.l.b16 %v227
        %v456 = vunpack.c.l.b16 %v228
        %v457 = vunpack.c.l.b16 %v229
        %v458 = vunpack.c.l.b16 %v230
        %v459 = vunpack.c.l.b16 %v231
        %v460 = vunpack.c.l.b16 %v232
        %v461 = vunpack.c.l.b16 %v233
        %v462 = vunpack.c.l.b16 %v234
        %v463 = vunpack.c.l.b16 %v235
        %v464 = vunpack.c.l.b16 %v236
        %v465 = vunpack.c.l.b16 %v237
        %v466 = vunpack.c.l.b16 %v238
        %v467 = vunpack.c.l.b16 %v239
        %v468 = vunpack.c.l.b16 %v240
        %v469 = vunpack.c.l.b16 %v241
        %v470 = vunpack.c.l.b16 %v242
        %v471 = vunpack.c.l.b16 %v243
        %v472 = vunpack.c.l.b16 %v244
        %v473 = vunpack.c.l.b16 %v245
        %v474 = vunpack.c.l.b16 %v246
        %v475 = vunpack.c.l.b16 %v247
        %v476 = vunpack.c.l.b16 %v248
        %v477 = vunpack.c.l.b16 %v249
        %v478 = vunpack.c.l.b16 %v250
        %v479 = vunpack.c.l.b16 %v251
        %v480 = vunpack.c.l.b16 %v252
        %v481 = vunpack.c.l.b16 %v253
        %v482 = vunpack.c.l.b16 %v254
        %v483 = vpack.c.b16 %v436, %v435
        %v484 = vpack.c.b16 %v438, %v437
        %v485 = vpack.c.b16 %v440, %v439
        %v486 = vpack.c.b16 %v442, %v441
        %v487 = vpack.c.b16 %v444, %v443
        %v488 = vpack.c.b16 %v446, %v445
        %v489 = vpack.c.b16 %v448, %v447
        %v490 = vpack.c.b16 %v450, %v449
        %v491 = vpack.c.b16 %v452, %v451
        %v492 = vpack.c.b16 %v454, %v453
        %v493 = vpack.c.b16 %v456, %v455
        %v494 = vpack.c.b16 %v458, %v457
        %v495 = vpack.c.b16 %v460, %v459
        %v496 = vpack.c.b16 %v462, %v461
        %v497 = vpack.c.b16 %v464, %v463
        %v498 = vpack.c.b16 %v466, %v465
        %v499 = vpack.c.b16 %v468, %v467
        %v500 = vpack.c.b16 %v470, %v469
        %v501 = vpack.c.b16 %v472, %v471
        %v502 = vpack.c.b16 %v474, %v473
        %v503 = vpack.c.b16 %v476, %v475
        %v504 = vpack.c.b16 %v478, %v477
        %v505 = vpack.c.b16 %v480, %v479
        %v506 = vpack.c.b16 %v482, %v481
        %531 = vmatpush.bf16.msra.mxu0 %v490
        %532 = vmatpush.bf16.msra.mxu0 %v489
        %533 = vmatpush.bf16.msra.mxu0 %v488
        %534 = vmatpush.bf16.msra.mxu0 %v487
        %535 = vmatpush.bf16.msra.mxu0 %v486
        %536 = vmatpush.bf16.msra.mxu0 %v485
        %537 = vmatpush.bf16.msra.mxu0 %v484
        %538 = vmatpush.bf16.msra.mxu0 %v483
        %539 = vmatmul.bf16.gmra.mxu0 %v339
        %v540 = vpop.f32.mrf.mxu0
        %v541 = vadd.f32 %v257, %v540
        %v542 = vpop.f32.mrf.mxu0
        %v543 = vadd.f32 %v257, %v542
        %544 = vmatmul.bf16.gmra.mxu0 %v342
        %v545 = vpop.f32.mrf.mxu0
        %v546 = vadd.f32 %v257, %v545
        %v547 = vpop.f32.mrf.mxu0
        %v548 = vadd.f32 %v257, %v547
        %549 = vmatmul.bf16.gmra.mxu0 %v345
        %v550 = vpop.f32.mrf.mxu0
        %v551 = vadd.f32 %v257, %v550
        %v552 = vpop.f32.mrf.mxu0
        %v553 = vadd.f32 %v257, %v552
        %554 = vmatmul.bf16.gmra.mxu0 %v348
        %v555 = vpop.f32.mrf.mxu0
        %v556 = vadd.f32 %v257, %v555
        %v557 = vpop.f32.mrf.mxu0
        %v558 = vadd.f32 %v257, %v557
        %559 = vmatmul.bf16.gmra.mxu0 %v351
        %v560 = vpop.f32.mrf.mxu0
        %v561 = vadd.f32 %v257, %v560
        %v562 = vpop.f32.mrf.mxu0
        %v563 = vadd.f32 %v257, %v562
        %564 = vmatmul.bf16.gmra.mxu0 %v354
        %v565 = vpop.f32.mrf.mxu0
        %v566 = vadd.f32 %v257, %v565
        %v567 = vpop.f32.mrf.mxu0
        %v568 = vadd.f32 %v257, %v567
        %569 = vmatmul.bf16.gmra.mxu0 %v357
        %v570 = vpop.f32.mrf.mxu0
        %v571 = vadd.f32 %v257, %v570
        %v572 = vpop.f32.mrf.mxu0
        %v573 = vadd.f32 %v257, %v572
        %574 = vmatmul.bf16.gmra.mxu0 %v360
        %v575 = vpop.f32.mrf.mxu0
        %v576 = vadd.f32 %v257, %v575
        %v577 = vpop.f32.mrf.mxu0
        %v578 = vadd.f32 %v257, %v577
        %579 = vdwg.mxu0
        %580 = vmatpush.bf16.msra.mxu0 %v498
        %581 = vmatpush.bf16.msra.mxu0 %v497
        %582 = vmatpush.bf16.msra.mxu0 %v496
        %583 = vmatpush.bf16.msra.mxu0 %v495
        %584 = vmatpush.bf16.msra.mxu0 %v494
        %585 = vmatpush.bf16.msra.mxu0 %v493
        %586 = vmatpush.bf16.msra.mxu0 %v492
        %587 = vmatpush.bf16.msra.mxu0 %v491
        %588 = vmatmul.bf16.gmra.mxu0 %v340
        %v589 = vpop.f32.mrf.mxu0
        %v590 = vadd.f32 %v541, %v589
        %v591 = vpop.f32.mrf.mxu0
        %v592 = vadd.f32 %v543, %v591
        %593 = vmatmul.bf16.gmra.mxu0 %v343
        %v594 = vpop.f32.mrf.mxu0
        %v595 = vadd.f32 %v546, %v594
        %v596 = vpop.f32.mrf.mxu0
        %v597 = vadd.f32 %v548, %v596
        %598 = vmatmul.bf16.gmra.mxu0 %v346
        %v599 = vpop.f32.mrf.mxu0
        %v600 = vadd.f32 %v551, %v599
        %v601 = vpop.f32.mrf.mxu0
        %v602 = vadd.f32 %v553, %v601
        %603 = vmatmul.bf16.gmra.mxu0 %v349
        %v604 = vpop.f32.mrf.mxu0
        %v605 = vadd.f32 %v556, %v604
        %v606 = vpop.f32.mrf.mxu0
        %v607 = vadd.f32 %v558, %v606
        %608 = vmatmul.bf16.gmra.mxu0 %v352
        %v609 = vpop.f32.mrf.mxu0
        %v610 = vadd.f32 %v561, %v609
        %v611 = vpop.f32.mrf.mxu0
        %v612 = vadd.f32 %v563, %v611
        %613 = vmatmul.bf16.gmra.mxu0 %v355
        %v614 = vpop.f32.mrf.mxu0
        %v615 = vadd.f32 %v566, %v614
        %v616 = vpop.f32.mrf.mxu0
        %v617 = vadd.f32 %v568, %v616
        %618 = vmatmul.bf16.gmra.mxu0 %v358
        %v619 = vpop.f32.mrf.mxu0
        %v620 = vadd.f32 %v571, %v619
        %v621 = vpop.f32.mrf.mxu0
        %v622 = vadd.f32 %v573, %v621
        %623 = vmatmul.bf16.gmra.mxu0 %v361
        %v624 = vpop.f32.mrf.mxu0
        %v625 = vadd.f32 %v576, %v624
        %v626 = vpop.f32.mrf.mxu0
        %v627 = vadd.f32 %v578, %v626
        %628 = vdwg.mxu0
        %629 = vmatpush.bf16.msra.mxu0 %v506
        %630 = vmatpush.bf16.msra.mxu0 %v505
        %631 = vmatpush.bf16.msra.mxu0 %v504
        %632 = vmatpush.bf16.msra.mxu0 %v503
        %633 = vmatpush.bf16.msra.mxu0 %v502
        %634 = vmatpush.bf16.msra.mxu0 %v501
        %635 = vmatpush.bf16.msra.mxu0 %v500
        %636 = vmatpush.bf16.msra.mxu0 %v499
        %637 = vmatmul.bf16.gmra.mxu0 %v341
        %v638 = vpop.f32.mrf.mxu0
        %v639 = vadd.f32 %v590, %v638
        %v640 = vpop.f32.mrf.mxu0
        %v641 = vadd.f32 %v592, %v640
        %642 = vmatmul.bf16.gmra.mxu0 %v344
        %v643 = vpop.f32.mrf.mxu0
        %v644 = vadd.f32 %v595, %v643
        %v645 = vpop.f32.mrf.mxu0
        %v646 = vadd.f32 %v597, %v645
        %647 = vmatmul.bf16.gmra.mxu0 %v347
        %v648 = vpop.f32.mrf.mxu0
        %v649 = vadd.f32 %v600, %v648
        %v650 = vpop.f32.mrf.mxu0
        %v651 = vadd.f32 %v602, %v650
        %652 = vmatmul.bf16.gmra.mxu0 %v350
        %v653 = vpop.f32.mrf.mxu0
        %v654 = vadd.f32 %v605, %v653
        %v655 = vpop.f32.mrf.mxu0
        %v656 = vadd.f32 %v607, %v655
        %657 = vmatmul.bf16.gmra.mxu0 %v353
        %v658 = vpop.f32.mrf.mxu0
        %v659 = vadd.f32 %v610, %v658
        %v660 = vpop.f32.mrf.mxu0
        %v661 = vadd.f32 %v612, %v660
        %662 = vmatmul.bf16.gmra.mxu0 %v356
        %v663 = vpop.f32.mrf.mxu0
        %v664 = vadd.f32 %v615, %v663
        %v665 = vpop.f32.mrf.mxu0
        %v666 = vadd.f32 %v617, %v665
        %667 = vmatmul.bf16.gmra.mxu0 %v359
        %v668 = vpop.f32.mrf.mxu0
        %v669 = vadd.f32 %v620, %v668
        %v670 = vpop.f32.mrf.mxu0
        %v671 = vadd.f32 %v622, %v670
        %672 = vmatmul.bf16.gmra.mxu0 %v362
        %v673 = vpop.f32.mrf.mxu0
        %v674 = vadd.f32 %v625, %v673
        %v675 = vpop.f32.mrf.mxu0
        %v676 = vadd.f32 %v627, %v675
        %677 = vdwg.mxu0
        %v678 = vpack.c.bf16 %v639, %v639
        %v679 = vpack.c.bf16 %v641, %v641
        %v680 = vpack.c.bf16 %v644, %v644
        %v681 = vpack.c.bf16 %v646, %v646
        %v682 = vpack.c.bf16 %v649, %v649
        %v683 = vpack.c.bf16 %v651, %v651
        %v684 = vpack.c.bf16 %v654, %v654
        %v685 = vpack.c.bf16 %v656, %v656
        %v686 = vpack.c.bf16 %v659, %v659
        %v687 = vpack.c.bf16 %v661, %v661
        %v688 = vpack.c.bf16 %v664, %v664
        %v689 = vpack.c.bf16 %v666, %v666
        %v690 = vpack.c.bf16 %v669, %v669
        %v691 = vpack.c.bf16 %v671, %v671
        %v692 = vpack.c.bf16 %v674, %v674
        %v693 = vpack.c.bf16 %v676, %v676
        %694 = vst [vmem:[%s166] sm:$0xf] %v678
        %695 = vst [vmem:[%s166 + $0x4] sm:$0xf] %v679
        %696 = vst [vmem:[%s166 + $0x8] sm:$0xf] %v680
        %697 = vst [vmem:[%s166 + $0xc] sm:$0xf] %v681
        %698 = vst [vmem:[%s166 + $0x10] sm:$0xf] %v682
        %699 = vst [vmem:[%s166 + $0x14] sm:$0xf] %v683
        %700 = vst [vmem:[%s166 + $0x18] sm:$0xf] %v684
        %701 = vst [vmem:[%s166 + $0x1c] sm:$0xf] %v685
        %702 = vst [vmem:[%s166 + $0x20] sm:$0xf] %v686
        %703 = vst [vmem:[%s166 + $0x24] sm:$0xf] %v687
        %704 = vst [vmem:[%s166 + $0x28] sm:$0xf] %v688
        %705 = vst [vmem:[%s166 + $0x2c] sm:$0xf] %v689
        %706 = vst [vmem:[%s166 + $0x30] sm:$0xf] %v690
        %707 = vst [vmem:[%s166 + $0x34] sm:$0xf] %v691
        %708 = vst [vmem:[%s166 + $0x38] sm:$0xf] %v692
        %709 = vst [vmem:[%s166 + $0x3c] sm:$0xf] %v693
        %s710 = sand.u32 %s93, 1
        %s711 = scalar_lea.sflag [#allocation3], %s710
        %s712 = sand.u32 %s93, 1
        %s713 = smul.addr %s712, 64
        %s714 = scalar_lea.vmem [#allocation2], %s713
        // Predicated region
        $region33: #{a_call__.1} parent=31 // pred_check
          %p715 = pneg %p103
        $region34: #{a_call__.1} parent=31 // pred_check_branch
          %717 = sbr.rel (%p715) target = $region36
        $region35: #{a_call__.1} parent=31 // pred_region
          %s718 = smul.u32 16, %s17
          %720 = vsyncadd %s711, 0
          %s721 = smul.addr %s718, 4
          %s722 = scalar_lea.hbm %s3, %s721
          %s723 = sshll.u32 %s714, 4
          %s724 = int_to_ptr.vmem [resolvable:$true] %s723
          %s725 = sshll.u32 %s722, 4
          %s726 = int_to_ptr.hbm [resolvable:$true] %s725
          %731 = dma.vmem_to_hbm [thread:$0]  %s724, 1024, %s726, %s711, 64, 64, 4
        $region36: #{a_call__.1} parent=31 // pred_fallthru
          _
      $region32: #{a_call__.1} parent=5 // pred_fallthru
        _
      %p732 = scmp.le.s32.totalorder 2, %s12
      // Predicated region
      $region37: #{a_call__.1} parent=5 // pred_check
        %p733 = pneg %p732
      $region38: #{a_call__.1} parent=5 // pred_check_branch
        %735 = sbr.rel (%p733) target = $region40
      $region39: #{a_call__.1} parent=5 // pred_region
        %s736 = ssub.s32 %s12, 2
        // Predicated region
        $region41: #{a_call__.1} parent=39 // pred_check
          %p737 = pneg %p109
        $region42: #{a_call__.1} parent=39 // pred_check_branch
          %739 = sbr.rel (%p737) target = $region44
        $region43: #{a_call__.1} parent=39 // pred_region
          %s740 = sand.u32 %s94, 1
          %s741 = scalar_lea.sflag [#allocation3], %s740
          %s742 = sand.u32 %s94, 1
          %s743 = smul.addr %s742, 64
          %s744 = scalar_lea.vmem [#allocation2], %s743
          %746 = dma.done %s741, 1024
        $region44: #{a_call__.1} parent=39 // pred_fallthru
          _
      $region40: #{a_call__.1} parent=5 // pred_fallthru
        _
    $region6: #{a_call__.1} parent=1 // loop_footer
      %s16 = sadd.s32 1, %s12
    $region7: #{a_call__.1} parent=1 // loop_footer_branch
      %11 = sbr.rel target = $region3
    $region8: #{a_call__.1} parent=1 // loop_exit
      _
    %747 = vsyncpa [#allocation3], 1
    %s748 = scalar_lea.sflag [#allocation3], 1
    %749 = vsyncpa %s748, 1

</llo_original>
